<compile_context>
chip_gen: v5e
topology: v5e:2x2
jax: 0.10.0
libtpu: 0.0.40
codegen_flags: <defaults>
</compile_context>

<pallas_src>
import functools

import jax
import jax.numpy as jnp
from jax.experimental import pallas as pl
from jax.experimental.pallas import tpu as pltpu

EPS = 1e-8


def _round_up(x, m):
    return ((x + m - 1) // m) * m


def cmvib_kernel(Z, HOUT, pad_w,
                 ab_ref, mk_ref, wa_ref, ba_ref, wm_ref, bm_ref, dw_ref, db_ref,
                 out_ref):
    prec = jax.lax.Precision.HIGHEST

    # ---- per-modality encoders: two MXU dots -> lane-dense [mu | logvar] each ----
    a = jnp.dot(ab_ref[...], wa_ref[...],
                preferred_element_type=jnp.float32, precision=prec) + ba_ref[...]
    m = jnp.dot(mk_ref[...], wm_ref[...],
                preferred_element_type=jnp.float32, precision=prec) + bm_ref[...]
    a_mu, a_lv = a[:, :Z], a[:, Z:]
    m_mu, m_lv = m[:, :Z], m[:, Z:]

    # ---- Product of Experts: prior (mu=0, logvar=0) + abundance + markers ----
    # T_i = 1 / (exp(logvar_i) + eps + eps); prior expert: exp(0) = 1.
    # Exact reciprocals (kernel is memory-bound; the extra VPU work is free) for
    # ~1e-6 agreement with the reference instead of approx-reciprocal's ~1e-3.
    t0 = 1.0 / (1.0 + 2.0 * EPS)
    ta = 1.0 / (jnp.exp(a_lv) + 2.0 * EPS)
    tm = 1.0 / (jnp.exp(m_lv) + 2.0 * EPS)
    inv_s = 1.0 / (t0 + ta + tm)
    pd_mu = (a_mu * ta + m_mu * tm) * inv_s          # prior mu == 0
    pd_logvar = jnp.log(inv_s + EPS)

    # ---- eval-mode reparametrize ----
    z = pd_mu

    # ---- MultiHeadDecoder: ONE small f32 matmul producing ALL heads' logits ----
    # (per-row head selection is done in the wrapper; no head_idx stream needed)
    logits_all = jnp.dot(z, dw_ref[...],
                         preferred_element_type=jnp.float32, precision=prec) + db_ref[...]

    # ---- single lane-dense output slab [mu | logvar | all-head logits | 0pad] ----
    pieces = [pd_mu, pd_logvar, logits_all]
    if pad_w > 0:
        pieces.append(jnp.zeros((pd_mu.shape[0], pad_w), jnp.float32))
    out_ref[...] = jnp.concatenate(pieces, axis=-1)


def cmvib_forward(abundance, markers, head_idx, params, *,
                  batch_tile=1024, compute_dtype=jnp.bfloat16):
    """Fused CMVIB forward. Returns (mu, logvar, classification_logits)."""
    B, ABUND = abundance.shape
    MARK = markers.shape[1]
    Z = params["wa_mu"].shape[1]
    n_heads, _, OUT = params["w_dec"].shape
    HOUT = n_heads * OUT

    # ----- wrapper-side weight packing (tiny, one-time) -----
    wa = jnp.concatenate([params["wa_mu"], params["wa_lv"]], axis=1).astype(compute_dtype)  # (ABUND, 2Z)
    wm = jnp.concatenate([params["wm_mu"], params["wm_lv"]], axis=1).astype(compute_dtype)  # (MARK, 2Z)
    ba = jnp.concatenate([params["ba_mu"], params["ba_lv"]], axis=1).astype(jnp.float32)    # (1, 2Z)
    bm = jnp.concatenate([params["bm_mu"], params["bm_lv"]], axis=1).astype(jnp.float32)    # (1, 2Z)
    dw = params["w_dec"].transpose(1, 0, 2).reshape(Z, HOUT).astype(jnp.float32)            # (Z, H*OUT)
    db = params["b_dec"].reshape(1, HOUT).astype(jnp.float32)                               # (1, H*OUT)

    # Activations DMA'd in compute_dtype (bf16 default): halves input HBM traffic.
    ab = abundance.astype(compute_dtype)   # (B, ABUND)
    mk = markers.astype(compute_dtype)     # (B, MARK)

    # ----- batch tiling: multiple of 8 sublanes; aim for >= 2 grid steps so the
    #       "parallel" batch axis can shard across both v7x TensorCores -----
    batch_tile = max(8, _round_up(batch_tile, 8))
    TB = min(batch_tile, max(8, _round_up(pl.cdiv(B, 2), 8)))
    grid = (pl.cdiv(B, TB),)        # uneven last tile handled by masked boundary stores

    W_out = _round_up(2 * Z + HOUT, 128)   # lane-dense (unmasked vst) output slab width
    pad_w = W_out - (2 * Z + HOUT)

    batch_map = lambda i: (i, 0)
    const_map = lambda i: (0, 0)           # weights stay VMEM-resident across the grid

    slab = pl.pallas_call(
        functools.partial(cmvib_kernel, Z, HOUT, pad_w),
        out_shape=jax.ShapeDtypeStruct((B, W_out), jnp.float32),
        grid=grid,
        in_specs=[
            pl.BlockSpec((TB, ABUND), batch_map),       # abundance activations
            pl.BlockSpec((TB, MARK), batch_map),        # marker activations
            pl.BlockSpec((ABUND, 2 * Z), const_map),    # abundance encoder weight [mu|lv]
            pl.BlockSpec((1, 2 * Z), const_map),        # abundance encoder bias
            pl.BlockSpec((MARK, 2 * Z), const_map),     # marker encoder weight [mu|lv]
            pl.BlockSpec((1, 2 * Z), const_map),        # marker encoder bias
            pl.BlockSpec((Z, HOUT), const_map),         # packed decoder weight (all heads)
            pl.BlockSpec((1, HOUT), const_map),         # packed decoder bias (all heads)
        ],
        out_specs=pl.BlockSpec((TB, W_out), batch_map),
        compiler_params=pltpu.CompilerParams(
            dimension_semantics=("parallel",)),
    )(ab, mk, wa, ba, wm, bm, dw, db)

    # Callers that can consume the packed slab directly should do so; these slices are
    # small post-kernel passes kept only to match the module's (mu, logvar, logits) API.
    mu = slab[:, :Z]
    logvar = slab[:, Z:2 * Z]
    logits_all = slab[:, 2 * Z:2 * Z + HOUT].reshape(B, n_heads, OUT)
    hidx = head_idx.astype(jnp.int32).reshape(B, 1, 1)
    logits = jnp.take_along_axis(logits_all, hidx, axis=1)[:, 0, :]
    return mu, logvar, logits


def reference_forward(abundance, markers, head_idx, params):
    """Pure-JAX reference reproducing the PyTorch forward (eval mode)."""
    hp = "highest"
    a_mu = jnp.dot(abundance, params["wa_mu"], precision=hp) + params["ba_mu"]
    a_lv = jnp.dot(abundance, params["wa_lv"], precision=hp) + params["ba_lv"]
    m_mu = jnp.dot(markers, params["wm_mu"], precision=hp) + params["bm_mu"]
    m_lv = jnp.dot(markers, params["wm_lv"], precision=hp) + params["bm_lv"]
    mu_stack = jnp.stack([jnp.zeros_like(a_mu), a_mu, m_mu], 0)
    lv_stack = jnp.stack([jnp.zeros_like(a_lv), a_lv, m_lv], 0)
    var = jnp.exp(lv_stack) + EPS
    T = 1.0 / (var + EPS)
    pd_mu = jnp.sum(mu_stack * T, 0) / jnp.sum(T, 0)
    pd_var = 1.0 / jnp.sum(T, 0)
    pd_lv = jnp.log(pd_var + EPS)
    z = pd_mu
    w = params["w_dec"][head_idx]            # (B, Z, OUT)
    b = params["b_dec"][head_idx]            # (B, OUT)
    logits = jnp.einsum("ij,ijk->ik", z, w, precision=hp) + b
    return pd_mu, pd_lv, logits


if __name__ == "__main__":
    # small, CMVIB-consistent shapes
    B, ABUND, MARK, Z, COND, N_HEADS, OUT = 8, 64, 96, 32, 4, 3, 1

    key = jax.random.PRNGKey(0)
    ks = jax.random.split(key, 12)
    abundance = jax.random.normal(ks[0], (B, ABUND), jnp.float32)
    markers = jax.random.normal(ks[1], (B, MARK), jnp.float32)
    head_idx = jax.random.randint(ks[2], (B,), 0, N_HEADS, jnp.int32)
    x_cond = jax.random.normal(ks[3], (B, COND), jnp.float32)  # unused: no hidden CondBatchNorm layers

    def init_w(k, fan_in, shape):
        bound = 1.0 / jnp.sqrt(fan_in)
        return jax.random.uniform(k, shape, jnp.float32, -bound, bound)

    params = {
        "wa_mu": init_w(ks[4], ABUND, (ABUND, Z)), "ba_mu": init_w(ks[5], ABUND, (1, Z)),
        "wa_lv": init_w(ks[6], ABUND, (ABUND, Z)), "ba_lv": init_w(ks[7], ABUND, (1, Z)),
        "wm_mu": init_w(ks[8], MARK, (MARK, Z)),   "bm_mu": init_w(ks[9], MARK, (1, Z)),
        "wm_lv": init_w(ks[10], MARK, (MARK, Z)),  "bm_lv": init_w(ks[11], MARK, (1, Z)),
    }
    kd1, kd2 = jax.random.split(jax.random.fold_in(key, 99))
    params["w_dec"] = init_w(kd1, Z, (N_HEADS, Z, OUT))
    params["b_dec"] = init_w(kd2, Z, (N_HEADS, OUT))

    mu_r, lv_r, lg_r = reference_forward(abundance, markers, head_idx, params)

    # --- f32 path: exact PoE reciprocals + HIGHEST-precision matmuls -> tight agreement ---
    mu32, lv32, lg32 = jax.block_until_ready(
        cmvib_forward(abundance, markers, head_idx, params, compute_dtype=jnp.float32))
    assert jnp.allclose(mu32, mu_r, atol=2e-3, rtol=2e-3)
    assert jnp.allclose(lv32, lv_r, atol=2e-3, rtol=2e-3)
    assert jnp.allclose(lg32, lg_r, atol=2e-3, rtol=2e-3)

    # --- bf16 path (performance default: halved activation HBM traffic) ---
    mu16, lv16, lg16 = jax.block_until_ready(
        cmvib_forward(abundance, markers, head_idx, params))
    assert jnp.allclose(mu16, mu_r, atol=3e-2, rtol=3e-2)
    assert jnp.allclose(lv16, lv_r, atol=3e-2, rtol=3e-2)
    assert jnp.allclose(lg16, lg_r, atol=3e-2, rtol=3e-2)

    print("KERNEL_OK")
</pallas_src>

<mosaic_0001>
module attributes {stable_mosaic.version = 11 : i64} {
  func.func @cmvib_kernel(%arg0: i32, %arg1: memref<8x64xf32, #tpu.memory_space<vmem>>, %arg2: memref<8x96xf32, #tpu.memory_space<vmem>>, %arg3: memref<64x64xf32, #tpu.memory_space<vmem>>, %arg4: memref<1x64xf32, #tpu.memory_space<vmem>>, %arg5: memref<96x64xf32, #tpu.memory_space<vmem>>, %arg6: memref<1x64xf32, #tpu.memory_space<vmem>>, %arg7: memref<32x3xf32, #tpu.memory_space<vmem>>, %arg8: memref<1x3xf32, #tpu.memory_space<vmem>>, %arg9: memref<8x128xf32, #tpu.memory_space<vmem>>) attributes {dimension_semantics = [#tpu.dimension_semantics<parallel>], iteration_bounds = array<i64: 1>, scalar_prefetch = 0 : i64, scratch_operands = 0 : i64, tpu.core_type = #tpu.core_type<tc>, window_params = [{transform_indices = @transform_0, window_bounds = array<i64: 8, 64>}, {transform_indices = @transform_1, window_bounds = array<i64: 8, 96>}, {pipeline_mode = #tpu.pipeline_mode<synchronous>, transform_indices = @transform_2, window_bounds = array<i64: 64, 64>}, {pipeline_mode = #tpu.pipeline_mode<synchronous>, transform_indices = @transform_3, window_bounds = array<i64: 1, 64>}, {pipeline_mode = #tpu.pipeline_mode<synchronous>, transform_indices = @transform_4, window_bounds = array<i64: 96, 64>}, {pipeline_mode = #tpu.pipeline_mode<synchronous>, transform_indices = @transform_5, window_bounds = array<i64: 1, 64>}, {pipeline_mode = #tpu.pipeline_mode<synchronous>, transform_indices = @transform_6, window_bounds = array<i64: 32, 3>}, {pipeline_mode = #tpu.pipeline_mode<synchronous>, transform_indices = @transform_7, window_bounds = array<i64: 1, 3>}, {transform_indices = @transform_8, window_bounds = array<i64: 8, 128>}]} {
    %c0 = arith.constant 0 : index
    %c0_0 = arith.constant 0 : index
    %0 = vector.load %arg1[%c0, %c0_0] : memref<8x64xf32, #tpu.memory_space<vmem>>, vector<8x64xf32>
    %c0_1 = arith.constant 0 : index
    %c0_2 = arith.constant 0 : index
    %1 = vector.load %arg3[%c0_1, %c0_2] : memref<64x64xf32, #tpu.memory_space<vmem>>, vector<64x64xf32>
    %cst = arith.constant dense<0.000000e+00> : vector<8x64xf32>
    %2 = tpu.matmul %0, %1, %cst {dimension_numbers = #tpu.dot_dimension_numbers<[1], [0], [0], [1], [0, 0, 1, 1], [], []>, precision = #tpu.contract_precision<fp32>} : vector<8x64xf32>, vector<64x64xf32>, vector<8x64xf32> -> vector<8x64xf32>
    %c0_3 = arith.constant 0 : index
    %c0_4 = arith.constant 0 : index
    %3 = vector.load %arg4[%c0_3, %c0_4] : memref<1x64xf32, #tpu.memory_space<vmem>>, vector<1x64xf32>
    %4 = vector.broadcast %3 : vector<1x64xf32> to vector<8x64xf32>
    %5 = arith.addf %2, %4 : vector<8x64xf32>
    %c0_5 = arith.constant 0 : index
    %c0_6 = arith.constant 0 : index
    %6 = vector.load %arg2[%c0_5, %c0_6] : memref<8x96xf32, #tpu.memory_space<vmem>>, vector<8x96xf32>
    %c0_7 = arith.constant 0 : index
    %c0_8 = arith.constant 0 : index
    %7 = vector.load %arg5[%c0_7, %c0_8] : memref<96x64xf32, #tpu.memory_space<vmem>>, vector<96x64xf32>
    %cst_9 = arith.constant dense<0.000000e+00> : vector<8x64xf32>
    %8 = tpu.matmul %6, %7, %cst_9 {dimension_numbers = #tpu.dot_dimension_numbers<[1], [0], [0], [1], [0, 0, 1, 1], [], []>, precision = #tpu.contract_precision<fp32>} : vector<8x96xf32>, vector<96x64xf32>, vector<8x64xf32> -> vector<8x64xf32>
    %c0_10 = arith.constant 0 : index
    %c0_11 = arith.constant 0 : index
    %9 = vector.load %arg6[%c0_10, %c0_11] : memref<1x64xf32, #tpu.memory_space<vmem>>, vector<1x64xf32>
    %10 = vector.broadcast %9 : vector<1x64xf32> to vector<8x64xf32>
    %11 = arith.addf %8, %10 : vector<8x64xf32>
    %12 = vector.extract_strided_slice %5 {offsets = [0, 0], sizes = [8, 32], strides = [1, 1]} : vector<8x64xf32> to vector<8x32xf32>
    %13 = vector.extract_strided_slice %5 {offsets = [0, 32], sizes = [8, 32], strides = [1, 1]} : vector<8x64xf32> to vector<8x32xf32>
    %14 = vector.extract_strided_slice %11 {offsets = [0, 0], sizes = [8, 32], strides = [1, 1]} : vector<8x64xf32> to vector<8x32xf32>
    %15 = vector.extract_strided_slice %11 {offsets = [0, 32], sizes = [8, 32], strides = [1, 1]} : vector<8x64xf32> to vector<8x32xf32>
    %16 = math.exp %13 : vector<8x32xf32>
    %cst_12 = arith.constant 2.000000e-08 : f32
    %17 = vector.broadcast %cst_12 : f32 to vector<8x32xf32>
    %18 = arith.addf %16, %17 : vector<8x32xf32>
    %cst_13 = arith.constant 1.000000e+00 : f32
    %19 = vector.broadcast %cst_13 : f32 to vector<8x32xf32>
    %20 = arith.divf %19, %18 : vector<8x32xf32>
    %21 = math.exp %15 : vector<8x32xf32>
    %cst_14 = arith.constant 2.000000e-08 : f32
    %22 = vector.broadcast %cst_14 : f32 to vector<8x32xf32>
    %23 = arith.addf %21, %22 : vector<8x32xf32>
    %cst_15 = arith.constant 1.000000e+00 : f32
    %24 = vector.broadcast %cst_15 : f32 to vector<8x32xf32>
    %25 = arith.divf %24, %23 : vector<8x32xf32>
    %cst_16 = arith.constant 1.000000e+00 : f32
    %26 = vector.broadcast %cst_16 : f32 to vector<8x32xf32>
    %27 = arith.addf %26, %20 : vector<8x32xf32>
    %28 = arith.addf %27, %25 : vector<8x32xf32>
    %cst_17 = arith.constant 1.000000e+00 : f32
    %29 = vector.broadcast %cst_17 : f32 to vector<8x32xf32>
    %30 = arith.divf %29, %28 : vector<8x32xf32>
    %31 = arith.mulf %12, %20 : vector<8x32xf32>
    %32 = arith.mulf %14, %25 : vector<8x32xf32>
    %33 = arith.addf %31, %32 : vector<8x32xf32>
    %34 = arith.mulf %33, %30 : vector<8x32xf32>
    %cst_18 = arith.constant 9.99999993E-9 : f32
    %35 = vector.broadcast %cst_18 : f32 to vector<8x32xf32>
    %36 = arith.addf %30, %35 : vector<8x32xf32>
    %37 = math.log %36 : vector<8x32xf32>
    %c0_19 = arith.constant 0 : index
    %c0_20 = arith.constant 0 : index
    %38 = vector.load %arg7[%c0_19, %c0_20] : memref<32x3xf32, #tpu.memory_space<vmem>>, vector<32x3xf32>
    %cst_21 = arith.constant dense<0.000000e+00> : vector<8x3xf32>
    %39 = tpu.matmul %34, %38, %cst_21 {dimension_numbers = #tpu.dot_dimension_numbers<[1], [0], [0], [1], [0, 0, 1, 1], [], []>, precision = #tpu.contract_precision<fp32>} : vector<8x32xf32>, vector<32x3xf32>, vector<8x3xf32> -> vector<8x3xf32>
    %c0_22 = arith.constant 0 : index
    %c0_23 = arith.constant 0 : index
    %40 = vector.load %arg8[%c0_22, %c0_23] : memref<1x3xf32, #tpu.memory_space<vmem>>, vector<1x3xf32>
    %41 = vector.broadcast %40 : vector<1x3xf32> to vector<8x3xf32>
    %42 = arith.addf %39, %41 : vector<8x3xf32>
    %cst_24 = arith.constant 0.000000e+00 : f32
    %43 = vector.broadcast %cst_24 : f32 to vector<8x61xf32>
    %44 = tpu.concatenate %34, %37, %42, %43 in 1 : vector<8x32xf32>, vector<8x32xf32>, vector<8x3xf32>, vector<8x61xf32> -> vector<8x128xf32>
    %c0_25 = arith.constant 0 : index
    %c0_26 = arith.constant 0 : index
    %45 = vector.load %arg9[%c0_25, %c0_26] : memref<8x128xf32, #tpu.memory_space<vmem>>, vector<8x128xf32>
    tpu.vector_store %arg9[%c0_25, %c0_26], %44 {strides = array<i32>} : memref<8x128xf32, #tpu.memory_space<vmem>>, vector<8x128xf32>,
    return
  }
  func.func @transform_0(%arg0: i32) -> (i32, i32) {
    %c0_i32 = arith.constant 0 : i32
    %c0_i32_0 = arith.constant 0 : i32
    return %arg0, %c0_i32 : i32, i32
  }
  func.func @transform_1(%arg0: i32) -> (i32, i32) {
    %c0_i32 = arith.constant 0 : i32
    %c0_i32_0 = arith.constant 0 : i32
    return %arg0, %c0_i32 : i32, i32
  }
  func.func @transform_2(%arg0: i32) -> (i32, i32) {
    %c0_i32 = arith.constant 0 : i32
    %c0_i32_0 = arith.constant 0 : i32
    %c0_i32_1 = arith.constant 0 : i32
    return %c0_i32, %c0_i32_0 : i32, i32
  }
  func.func @transform_3(%arg0: i32) -> (i32, i32) {
    %c0_i32 = arith.constant 0 : i32
    %c0_i32_0 = arith.constant 0 : i32
    %c0_i32_1 = arith.constant 0 : i32
    return %c0_i32, %c0_i32_0 : i32, i32
  }
  func.func @transform_4(%arg0: i32) -> (i32, i32) {
    %c0_i32 = arith.constant 0 : i32
    %c0_i32_0 = arith.constant 0 : i32
    %c0_i32_1 = arith.constant 0 : i32
    return %c0_i32, %c0_i32_0 : i32, i32
  }
  func.func @transform_5(%arg0: i32) -> (i32, i32) {
    %c0_i32 = arith.constant 0 : i32
    %c0_i32_0 = arith.constant 0 : i32
    %c0_i32_1 = arith.constant 0 : i32
    return %c0_i32, %c0_i32_0 : i32, i32
  }
  func.func @transform_6(%arg0: i32) -> (i32, i32) {
    %c0_i32 = arith.constant 0 : i32
    %c0_i32_0 = arith.constant 0 : i32
    %c0_i32_1 = arith.constant 0 : i32
    return %c0_i32, %c0_i32_0 : i32, i32
  }
  func.func @transform_7(%arg0: i32) -> (i32, i32) {
    %c0_i32 = arith.constant 0 : i32
    %c0_i32_0 = arith.constant 0 : i32
    %c0_i32_1 = arith.constant 0 : i32
    return %c0_i32, %c0_i32_0 : i32, i32
  }
  func.func @transform_8(%arg0: i32) -> (i32, i32) {
    %c0_i32 = arith.constant 0 : i32
    %c0_i32_0 = arith.constant 0 : i32
    return %arg0, %c0_i32 : i32, i32
  }
}

</mosaic_0001>

<llo_original>
// kernel: tpu_custom_call.1
$region0: #{tpu_custom_call.1}
  #allocation0 [shape = 'u32[]', space=smem, size = 0x4, offset = 0x4, fixed_abs, tag = 'smem constant byte address 0x4 - core index']
  #allocation1 [shape = 'u32[72,128]{1,0:T(1,128)}', space=vmem, size = 0x9000, scoped, tag = 'internal scratch']
  %s0 = inlined_call_operand.vmem [shape: f32[8,64], index: 0, kind: input, shape index: {}]
  %s1 = inlined_call_operand.vmem [shape: f32[8,96], index: 1, kind: input, shape index: {}]
  %s2 = inlined_call_operand.vmem [shape: f32[64,64], index: 2, kind: input, shape index: {}]
  %s3 = inlined_call_operand.vmem [shape: f32[1,64], index: 3, kind: input, shape index: {}]
  %s4 = inlined_call_operand.vmem [shape: f32[96,64], index: 4, kind: input, shape index: {}]
  %s5 = inlined_call_operand.vmem [shape: f32[1,64], index: 5, kind: input, shape index: {}]
  %s6 = inlined_call_operand.vmem [shape: f32[32,3], index: 6, kind: input, shape index: {}]
  %s7 = inlined_call_operand.vmem [shape: f32[1,3], index: 7, kind: input, shape index: {}]
  %s8 = inlined_call_operand.hbm [shape: f32[8,128], index: 8, kind: output, shape index: {}]
  %s9 = sld [smem:[#allocation0]]
  $region42: #{tpu_custom_call.1} parent=0
    _
  %s11 = ssub.s32 1, %s9
  %s12 = scalar_select 0, %s11, %s9
  $region1: #{tpu_custom_call.1} parent=0
    #allocation2 [shape = 'u8[4096]{0}', space=vmem, size = 0x1000, scoped, tag = 'output window, operand 0, single buffered']
    #allocation3 [shape = 's32[1]{0}', space=sflag, size = 0x4, scoped, tag = 'scoped memory for tpu_custom_call.1']
    %13 = vsyncpa [#allocation3], 0
    // Predicated region
    $region2: #{tpu_custom_call.1} parent=1 // pred_check
      _
    $region3: #{tpu_custom_call.1} parent=1 // pred_check_branch
      %15 = sbr.rel (0) target = $region5
    $region4: #{tpu_custom_call.1} parent=1 // pred_region
      _
    $region5: #{tpu_custom_call.1} parent=1 // pred_fallthru
      _
    // Predicated region
    $region6: #{tpu_custom_call.1} parent=1 // pred_check
      _
    $region7: #{tpu_custom_call.1} parent=1 // pred_check_branch
      %17 = sbr.rel (0) target = $region9
    $region8: #{tpu_custom_call.1} parent=1 // pred_region
      _
    $region9: #{tpu_custom_call.1} parent=1 // pred_fallthru
      _
    // Predicated region
    $region10: #{tpu_custom_call.1} parent=1 // pred_check
      _
    $region11: #{tpu_custom_call.1} parent=1 // pred_check_branch
      %19 = sbr.rel (0) target = $region13
    $region12: #{tpu_custom_call.1} parent=1 // pred_region
      _
    $region13: #{tpu_custom_call.1} parent=1 // pred_fallthru
      _
    // Predicated region
    $region14: #{tpu_custom_call.1} parent=1 // pred_check
      _
    $region15: #{tpu_custom_call.1} parent=1 // pred_check_branch
      %21 = sbr.rel (0) target = $region17
    $region16: #{tpu_custom_call.1} parent=1 // pred_region
      _
    $region17: #{tpu_custom_call.1} parent=1 // pred_fallthru
      _
    // Predicated region
    $region18: #{tpu_custom_call.1} parent=1 // pred_check
      _
    $region19: #{tpu_custom_call.1} parent=1 // pred_check_branch
      %23 = sbr.rel (0) target = $region21
    $region20: #{tpu_custom_call.1} parent=1 // pred_region
      _
    $region21: #{tpu_custom_call.1} parent=1 // pred_fallthru
      _
    // Predicated region
    $region22: #{tpu_custom_call.1} parent=1 // pred_check
      _
    $region23: #{tpu_custom_call.1} parent=1 // pred_check_branch
      %25 = sbr.rel (0) target = $region25
    $region24: #{tpu_custom_call.1} parent=1 // pred_region
      _
    $region25: #{tpu_custom_call.1} parent=1 // pred_fallthru
      _
    // Predicated region
    $region26: #{tpu_custom_call.1} parent=1 // pred_check
      _
    $region27: #{tpu_custom_call.1} parent=1 // pred_check_branch
      %27 = sbr.rel (0) target = $region29
    $region28: #{tpu_custom_call.1} parent=1 // pred_region
      _
    $region29: #{tpu_custom_call.1} parent=1 // pred_fallthru
      _
    // Predicated region
    $region30: #{tpu_custom_call.1} parent=1 // pred_check
      _
    $region31: #{tpu_custom_call.1} parent=1 // pred_check_branch
      %29 = sbr.rel (0) target = $region33
    $region32: #{tpu_custom_call.1} parent=1 // pred_region
      _
    $region33: #{tpu_custom_call.1} parent=1 // pred_fallthru
      _
    %v30 = vld [vmem:[%s0] sm:$0xff]
    %v31 = vld [vmem:[%s2] sm:$0xff]
    %v32 = vld [vmem:[%s2 + $0x8] sm:$0xff]
    %v33 = vld [vmem:[%s2 + $0x10] sm:$0xff]
    %v34 = vld [vmem:[%s2 + $0x18] sm:$0xff]
    %v35 = vld [vmem:[%s2 + $0x20] sm:$0xff]
    %v36 = vld [vmem:[%s2 + $0x28] sm:$0xff]
    %v37 = vld [vmem:[%s2 + $0x30] sm:$0xff]
    %v38 = vld [vmem:[%s2 + $0x38] sm:$0xff]
    %v39 = vld [vmem:[%s3] sm:$0x1]
    %v41 = vperm.slane %v39, 0
    %vm43 = vcmask 523264
    %v45 = vsel %vm43, %v30, 0
    %47 = vmatpush.msra.mxu0 0.0
    %48 = vmatpush.msra.mxu0 0.0
    %49 = vmatpush.msra.mxu0 0.0
    %50 = vmatpush.msra.mxu0 0.0
    %51 = vmatpush.msra.mxu0 0.0
    %52 = vmatpush.msra.mxu0 0.0
    %53 = vmatpush.msra.mxu0 0.0
    %54 = vmatpush.msra.mxu0 0.0
    %v55 = vand.u32 %v38, 4294901760
    %56 = vmatpush.msra.mxu0 %v55
    %v57 = vand.u32 %v37, 4294901760
    %58 = vmatpush.msra.mxu0 %v57
    %v59 = vand.u32 %v36, 4294901760
    %60 = vmatpush.msra.mxu0 %v59
    %v61 = vand.u32 %v35, 4294901760
    %62 = vmatpush.msra.mxu0 %v61
    %v63 = vand.u32 %v34, 4294901760
    %64 = vmatpush.msra.mxu0 %v63
    %v65 = vand.u32 %v33, 4294901760
    %66 = vmatpush.msra.mxu0 %v65
    %v67 = vand.u32 %v32, 4294901760
    %68 = vmatpush.msra.mxu0 %v67
    %v69 = vand.u32 %v31, 4294901760
    %70 = vmatpush.msra.mxu0 %v69
    %v71 = vand.u32 %v45, 4294901760
    %v72 = vsub.f32 %v45, %v71
    %v73 = vand.u32 %v72, 4294901760
    %v74 = vsub.f32 %v72, %v73
    %v75 = vand.u32 %v74, 4294901760
    %76 = vmatmul.f32.gmra.mxu0 %v75
    %v77 = vpop.f32.mrf.mxu0
    %v78 = vadd.f32 %v41, %v77
    %79 = vdwg.mxu0
    %80 = vmatpush.msra.mxu0 0.0
    %81 = vmatpush.msra.mxu0 0.0
    %82 = vmatpush.msra.mxu0 0.0
    %83 = vmatpush.msra.mxu0 0.0
    %84 = vmatpush.msra.mxu0 0.0
    %85 = vmatpush.msra.mxu0 0.0
    %86 = vmatpush.msra.mxu0 0.0
    %87 = vmatpush.msra.mxu0 0.0
    %v88 = vand.u32 %v38, 4294901760
    %v89 = vsub.f32 %v38, %v88
    %v90 = vand.u32 %v89, 4294901760
    %v91 = vsub.f32 %v89, %v90
    %v92 = vand.u32 %v91, 4294901760
    %93 = vmatpush.msra.mxu0 %v92
    %v94 = vand.u32 %v37, 4294901760
    %v95 = vsub.f32 %v37, %v94
    %v96 = vand.u32 %v95, 4294901760
    %v97 = vsub.f32 %v95, %v96
    %v98 = vand.u32 %v97, 4294901760
    %99 = vmatpush.msra.mxu0 %v98
    %v100 = vand.u32 %v36, 4294901760
    %v101 = vsub.f32 %v36, %v100
    %v102 = vand.u32 %v101, 4294901760
    %v103 = vsub.f32 %v101, %v102
    %v104 = vand.u32 %v103, 4294901760
    %105 = vmatpush.msra.mxu0 %v104
    %v106 = vand.u32 %v35, 4294901760
    %v107 = vsub.f32 %v35, %v106
    %v108 = vand.u32 %v107, 4294901760
    %v109 = vsub.f32 %v107, %v108
    %v110 = vand.u32 %v109, 4294901760
    %111 = vmatpush.msra.mxu0 %v110
    %v112 = vand.u32 %v34, 4294901760
    %v113 = vsub.f32 %v34, %v112
    %v114 = vand.u32 %v113, 4294901760
    %v115 = vsub.f32 %v113, %v114
    %v116 = vand.u32 %v115, 4294901760
    %117 = vmatpush.msra.mxu0 %v116
    %v118 = vand.u32 %v33, 4294901760
    %v119 = vsub.f32 %v33, %v118
    %v120 = vand.u32 %v119, 4294901760
    %v121 = vsub.f32 %v119, %v120
    %v122 = vand.u32 %v121, 4294901760
    %123 = vmatpush.msra.mxu0 %v122
    %v124 = vand.u32 %v32, 4294901760
    %v125 = vsub.f32 %v32, %v124
    %v126 = vand.u32 %v125, 4294901760
    %v127 = vsub.f32 %v125, %v126
    %v128 = vand.u32 %v127, 4294901760
    %129 = vmatpush.msra.mxu0 %v128
    %v130 = vand.u32 %v31, 4294901760
    %v131 = vsub.f32 %v31, %v130
    %v132 = vand.u32 %v131, 4294901760
    %v133 = vsub.f32 %v131, %v132
    %v134 = vand.u32 %v133, 4294901760
    %135 = vmatpush.msra.mxu0 %v134
    %v136 = vand.u32 %v45, 4294901760
    %137 = vmatmul.f32.gmra.mxu0 %v136
    %v138 = vpop.f32.mrf.mxu0
    %v139 = vadd.f32 %v78, %v138
    %140 = vdwg.mxu0
    %141 = vmatpush.msra.mxu0 0.0
    %142 = vmatpush.msra.mxu0 0.0
    %143 = vmatpush.msra.mxu0 0.0
    %144 = vmatpush.msra.mxu0 0.0
    %145 = vmatpush.msra.mxu0 0.0
    %146 = vmatpush.msra.mxu0 0.0
    %147 = vmatpush.msra.mxu0 0.0
    %148 = vmatpush.msra.mxu0 0.0
    %v149 = vand.u32 %v38, 4294901760
    %v150 = vsub.f32 %v38, %v149
    %151 = vmatpush.msra.mxu0 %v150
    %v152 = vand.u32 %v37, 4294901760
    %v153 = vsub.f32 %v37, %v152
    %154 = vmatpush.msra.mxu0 %v153
    %v155 = vand.u32 %v36, 4294901760
    %v156 = vsub.f32 %v36, %v155
    %157 = vmatpush.msra.mxu0 %v156
    %v158 = vand.u32 %v35, 4294901760
    %v159 = vsub.f32 %v35, %v158
    %160 = vmatpush.msra.mxu0 %v159
    %v161 = vand.u32 %v34, 4294901760
    %v162 = vsub.f32 %v34, %v161
    %163 = vmatpush.msra.mxu0 %v162
    %v164 = vand.u32 %v33, 4294901760
    %v165 = vsub.f32 %v33, %v164
    %166 = vmatpush.msra.mxu0 %v165
    %v167 = vand.u32 %v32, 4294901760
    %v168 = vsub.f32 %v32, %v167
    %169 = vmatpush.msra.mxu0 %v168
    %v170 = vand.u32 %v31, 4294901760
    %v171 = vsub.f32 %v31, %v170
    %172 = vmatpush.msra.mxu0 %v171
    %v173 = vand.u32 %v45, 4294901760
    %v174 = vsub.f32 %v45, %v173
    %175 = vmatmul.f32.gmra.mxu0 %v174
    %v176 = vpop.f32.mrf.mxu0
    %v177 = vadd.f32 %v139, %v176
    %178 = vdwg.mxu0
    %179 = vmatpush.msra.mxu0 0.0
    %180 = vmatpush.msra.mxu0 0.0
    %181 = vmatpush.msra.mxu0 0.0
    %182 = vmatpush.msra.mxu0 0.0
    %183 = vmatpush.msra.mxu0 0.0
    %184 = vmatpush.msra.mxu0 0.0
    %185 = vmatpush.msra.mxu0 0.0
    %186 = vmatpush.msra.mxu0 0.0
    %v187 = vand.u32 %v38, 4294901760
    %188 = vmatpush.msra.mxu0 %v187
    %v189 = vand.u32 %v37, 4294901760
    %190 = vmatpush.msra.mxu0 %v189
    %v191 = vand.u32 %v36, 4294901760
    %192 = vmatpush.msra.mxu0 %v191
    %v193 = vand.u32 %v35, 4294901760
    %194 = vmatpush.msra.mxu0 %v193
    %v195 = vand.u32 %v34, 4294901760
    %196 = vmatpush.msra.mxu0 %v195
    %v197 = vand.u32 %v33, 4294901760
    %198 = vmatpush.msra.mxu0 %v197
    %v199 = vand.u32 %v32, 4294901760
    %200 = vmatpush.msra.mxu0 %v199
    %v201 = vand.u32 %v31, 4294901760
    %202 = vmatpush.msra.mxu0 %v201
    %v203 = vand.u32 %v45, 4294901760
    %v204 = vsub.f32 %v45, %v203
    %v205 = vand.u32 %v204, 4294901760
    %206 = vmatmul.f32.gmra.mxu0 %v205
    %v207 = vpop.f32.mrf.mxu0
    %v208 = vadd.f32 %v177, %v207
    %209 = vdwg.mxu0
    %210 = vmatpush.msra.mxu0 0.0
    %211 = vmatpush.msra.mxu0 0.0
    %212 = vmatpush.msra.mxu0 0.0
    %213 = vmatpush.msra.mxu0 0.0
    %214 = vmatpush.msra.mxu0 0.0
    %215 = vmatpush.msra.mxu0 0.0
    %216 = vmatpush.msra.mxu0 0.0
    %217 = vmatpush.msra.mxu0 0.0
    %v218 = vand.u32 %v38, 4294901760
    %v219 = vsub.f32 %v38, %v218
    %v220 = vand.u32 %v219, 4294901760
    %221 = vmatpush.msra.mxu0 %v220
    %v222 = vand.u32 %v37, 4294901760
    %v223 = vsub.f32 %v37, %v222
    %v224 = vand.u32 %v223, 4294901760
    %225 = vmatpush.msra.mxu0 %v224
    %v226 = vand.u32 %v36, 4294901760
    %v227 = vsub.f32 %v36, %v226
    %v228 = vand.u32 %v227, 4294901760
    %229 = vmatpush.msra.mxu0 %v228
    %v230 = vand.u32 %v35, 4294901760
    %v231 = vsub.f32 %v35, %v230
    %v232 = vand.u32 %v231, 4294901760
    %233 = vmatpush.msra.mxu0 %v232
    %v234 = vand.u32 %v34, 4294901760
    %v235 = vsub.f32 %v34, %v234
    %v236 = vand.u32 %v235, 4294901760
    %237 = vmatpush.msra.mxu0 %v236
    %v238 = vand.u32 %v33, 4294901760
    %v239 = vsub.f32 %v33, %v238
    %v240 = vand.u32 %v239, 4294901760
    %241 = vmatpush.msra.mxu0 %v240
    %v242 = vand.u32 %v32, 4294901760
    %v243 = vsub.f32 %v32, %v242
    %v244 = vand.u32 %v243, 4294901760
    %245 = vmatpush.msra.mxu0 %v244
    %v246 = vand.u32 %v31, 4294901760
    %v247 = vsub.f32 %v31, %v246
    %v248 = vand.u32 %v247, 4294901760
    %249 = vmatpush.msra.mxu0 %v248
    %v250 = vand.u32 %v45, 4294901760
    %251 = vmatmul.f32.gmra.mxu0 %v250
    %v252 = vpop.f32.mrf.mxu0
    %v253 = vadd.f32 %v208, %v252
    %254 = vdwg.mxu0
    %255 = vmatpush.msra.mxu0 0.0
    %256 = vmatpush.msra.mxu0 0.0
    %257 = vmatpush.msra.mxu0 0.0
    %258 = vmatpush.msra.mxu0 0.0
    %259 = vmatpush.msra.mxu0 0.0
    %260 = vmatpush.msra.mxu0 0.0
    %261 = vmatpush.msra.mxu0 0.0
    %262 = vmatpush.msra.mxu0 0.0
    %v263 = vand.u32 %v38, 4294901760
    %264 = vmatpush.msra.mxu0 %v263
    %v265 = vand.u32 %v37, 4294901760
    %266 = vmatpush.msra.mxu0 %v265
    %v267 = vand.u32 %v36, 4294901760
    %268 = vmatpush.msra.mxu0 %v267
    %v269 = vand.u32 %v35, 4294901760
    %270 = vmatpush.msra.mxu0 %v269
    %v271 = vand.u32 %v34, 4294901760
    %272 = vmatpush.msra.mxu0 %v271
    %v273 = vand.u32 %v33, 4294901760
    %274 = vmatpush.msra.mxu0 %v273
    %v275 = vand.u32 %v32, 4294901760
    %276 = vmatpush.msra.mxu0 %v275
    %v277 = vand.u32 %v31, 4294901760
    %278 = vmatpush.msra.mxu0 %v277
    %v279 = vand.u32 %v45, 4294901760
    %280 = vmatmul.f32.gmra.mxu0 %v279
    %v281 = vpop.f32.mrf.mxu0
    %v282 = vadd.f32 %v253, %v281
    %283 = vdwg.mxu0
    %v284 = vld [vmem:[%s1] sm:$0xff]
    %v285 = vld [vmem:[%s4] sm:$0xff]
    %v286 = vld [vmem:[%s4 + $0x8] sm:$0xff]
    %v287 = vld [vmem:[%s4 + $0x10] sm:$0xff]
    %v288 = vld [vmem:[%s4 + $0x18] sm:$0xff]
    %v289 = vld [vmem:[%s4 + $0x20] sm:$0xff]
    %v290 = vld [vmem:[%s4 + $0x28] sm:$0xff]
    %v291 = vld [vmem:[%s4 + $0x30] sm:$0xff]
    %v292 = vld [vmem:[%s4 + $0x38] sm:$0xff]
    %v293 = vld [vmem:[%s4 + $0x40] sm:$0xff]
    %v294 = vld [vmem:[%s4 + $0x48] sm:$0xff]
    %v295 = vld [vmem:[%s4 + $0x50] sm:$0xff]
    %v296 = vld [vmem:[%s4 + $0x58] sm:$0xff]
    %v297 = vld [vmem:[%s5] sm:$0x1]
    %v299 = vperm.slane %v297, 0
    %vm301 = vcmask 785408
    %v303 = vsel %vm301, %v284, 0
    %305 = vmatpush.msra.mxu0 0.0
    %306 = vmatpush.msra.mxu0 0.0
    %307 = vmatpush.msra.mxu0 0.0
    %308 = vmatpush.msra.mxu0 0.0
    %v309 = vand.u32 %v296, 4294901760
    %310 = vmatpush.msra.mxu0 %v309
    %v311 = vand.u32 %v295, 4294901760
    %312 = vmatpush.msra.mxu0 %v311
    %v313 = vand.u32 %v294, 4294901760
    %314 = vmatpush.msra.mxu0 %v313
    %v315 = vand.u32 %v293, 4294901760
    %316 = vmatpush.msra.mxu0 %v315
    %v317 = vand.u32 %v292, 4294901760
    %318 = vmatpush.msra.mxu0 %v317
    %v319 = vand.u32 %v291, 4294901760
    %320 = vmatpush.msra.mxu0 %v319
    %v321 = vand.u32 %v290, 4294901760
    %322 = vmatpush.msra.mxu0 %v321
    %v323 = vand.u32 %v289, 4294901760
    %324 = vmatpush.msra.mxu0 %v323
    %v325 = vand.u32 %v288, 4294901760
    %326 = vmatpush.msra.mxu0 %v325
    %v327 = vand.u32 %v287, 4294901760
    %328 = vmatpush.msra.mxu0 %v327
    %v329 = vand.u32 %v286, 4294901760
    %330 = vmatpush.msra.mxu0 %v329
    %v331 = vand.u32 %v285, 4294901760
    %332 = vmatpush.msra.mxu0 %v331
    %v333 = vand.u32 %v303, 4294901760
    %v334 = vsub.f32 %v303, %v333
    %v335 = vand.u32 %v334, 4294901760
    %v336 = vsub.f32 %v334, %v335
    %v337 = vand.u32 %v336, 4294901760
    %338 = vmatmul.f32.gmra.mxu0 %v337
    %v339 = vpop.f32.mrf.mxu0
    %v340 = vadd.f32 %v299, %v339
    %341 = vdwg.mxu0
    %342 = vmatpush.msra.mxu0 0.0
    %343 = vmatpush.msra.mxu0 0.0
    %344 = vmatpush.msra.mxu0 0.0
    %345 = vmatpush.msra.mxu0 0.0
    %v346 = vand.u32 %v296, 4294901760
    %v347 = vsub.f32 %v296, %v346
    %v348 = vand.u32 %v347, 4294901760
    %v349 = vsub.f32 %v347, %v348
    %v350 = vand.u32 %v349, 4294901760
    %351 = vmatpush.msra.mxu0 %v350
    %v352 = vand.u32 %v295, 4294901760
    %v353 = vsub.f32 %v295, %v352
    %v354 = vand.u32 %v353, 4294901760
    %v355 = vsub.f32 %v353, %v354
    %v356 = vand.u32 %v355, 4294901760
    %357 = vmatpush.msra.mxu0 %v356
    %v358 = vand.u32 %v294, 4294901760
    %v359 = vsub.f32 %v294, %v358
    %v360 = vand.u32 %v359, 4294901760
    %v361 = vsub.f32 %v359, %v360
    %v362 = vand.u32 %v361, 4294901760
    %363 = vmatpush.msra.mxu0 %v362
    %v364 = vand.u32 %v293, 4294901760
    %v365 = vsub.f32 %v293, %v364
    %v366 = vand.u32 %v365, 4294901760
    %v367 = vsub.f32 %v365, %v366
    %v368 = vand.u32 %v367, 4294901760
    %369 = vmatpush.msra.mxu0 %v368
    %v370 = vand.u32 %v292, 4294901760
    %v371 = vsub.f32 %v292, %v370
    %v372 = vand.u32 %v371, 4294901760
    %v373 = vsub.f32 %v371, %v372
    %v374 = vand.u32 %v373, 4294901760
    %375 = vmatpush.msra.mxu0 %v374
    %v376 = vand.u32 %v291, 4294901760
    %v377 = vsub.f32 %v291, %v376
    %v378 = vand.u32 %v377, 4294901760
    %v379 = vsub.f32 %v377, %v378
    %v380 = vand.u32 %v379, 4294901760
    %381 = vmatpush.msra.mxu0 %v380
    %v382 = vand.u32 %v290, 4294901760
    %v383 = vsub.f32 %v290, %v382
    %v384 = vand.u32 %v383, 4294901760
    %v385 = vsub.f32 %v383, %v384
    %v386 = vand.u32 %v385, 4294901760
    %387 = vmatpush.msra.mxu0 %v386
    %v388 = vand.u32 %v289, 4294901760
    %v389 = vsub.f32 %v289, %v388
    %v390 = vand.u32 %v389, 4294901760
    %v391 = vsub.f32 %v389, %v390
    %v392 = vand.u32 %v391, 4294901760
    %393 = vmatpush.msra.mxu0 %v392
    %v394 = vand.u32 %v288, 4294901760
    %v395 = vsub.f32 %v288, %v394
    %v396 = vand.u32 %v395, 4294901760
    %v397 = vsub.f32 %v395, %v396
    %v398 = vand.u32 %v397, 4294901760
    %399 = vmatpush.msra.mxu0 %v398
    %v400 = vand.u32 %v287, 4294901760
    %v401 = vsub.f32 %v287, %v400
    %v402 = vand.u32 %v401, 4294901760
    %v403 = vsub.f32 %v401, %v402
    %v404 = vand.u32 %v403, 4294901760
    %405 = vmatpush.msra.mxu0 %v404
    %v406 = vand.u32 %v286, 4294901760
    %v407 = vsub.f32 %v286, %v406
    %v408 = vand.u32 %v407, 4294901760
    %v409 = vsub.f32 %v407, %v408
    %v410 = vand.u32 %v409, 4294901760
    %411 = vmatpush.msra.mxu0 %v410
    %v412 = vand.u32 %v285, 4294901760
    %v413 = vsub.f32 %v285, %v412
    %v414 = vand.u32 %v413, 4294901760
    %v415 = vsub.f32 %v413, %v414
    %v416 = vand.u32 %v415, 4294901760
    %417 = vmatpush.msra.mxu0 %v416
    %v418 = vand.u32 %v303, 4294901760
    %419 = vmatmul.f32.gmra.mxu0 %v418
    %v420 = vpop.f32.mrf.mxu0
    %v421 = vadd.f32 %v340, %v420
    %422 = vdwg.mxu0
    %423 = vmatpush.msra.mxu0 0.0
    %424 = vmatpush.msra.mxu0 0.0
    %425 = vmatpush.msra.mxu0 0.0
    %426 = vmatpush.msra.mxu0 0.0
    %v427 = vand.u32 %v296, 4294901760
    %v428 = vsub.f32 %v296, %v427
    %429 = vmatpush.msra.mxu0 %v428
    %v430 = vand.u32 %v295, 4294901760
    %v431 = vsub.f32 %v295, %v430
    %432 = vmatpush.msra.mxu0 %v431
    %v433 = vand.u32 %v294, 4294901760
    %v434 = vsub.f32 %v294, %v433
    %435 = vmatpush.msra.mxu0 %v434
    %v436 = vand.u32 %v293, 4294901760
    %v437 = vsub.f32 %v293, %v436
    %438 = vmatpush.msra.mxu0 %v437
    %v439 = vand.u32 %v292, 4294901760
    %v440 = vsub.f32 %v292, %v439
    %441 = vmatpush.msra.mxu0 %v440
    %v442 = vand.u32 %v291, 4294901760
    %v443 = vsub.f32 %v291, %v442
    %444 = vmatpush.msra.mxu0 %v443
    %v445 = vand.u32 %v290, 4294901760
    %v446 = vsub.f32 %v290, %v445
    %447 = vmatpush.msra.mxu0 %v446
    %v448 = vand.u32 %v289, 4294901760
    %v449 = vsub.f32 %v289, %v448
    %450 = vmatpush.msra.mxu0 %v449
    %v451 = vand.u32 %v288, 4294901760
    %v452 = vsub.f32 %v288, %v451
    %453 = vmatpush.msra.mxu0 %v452
    %v454 = vand.u32 %v287, 4294901760
    %v455 = vsub.f32 %v287, %v454
    %456 = vmatpush.msra.mxu0 %v455
    %v457 = vand.u32 %v286, 4294901760
    %v458 = vsub.f32 %v286, %v457
    %459 = vmatpush.msra.mxu0 %v458
    %v460 = vand.u32 %v285, 4294901760
    %v461 = vsub.f32 %v285, %v460
    %462 = vmatpush.msra.mxu0 %v461
    %v463 = vand.u32 %v303, 4294901760
    %v464 = vsub.f32 %v303, %v463
    %465 = vmatmul.f32.gmra.mxu0 %v464
    %v466 = vpop.f32.mrf.mxu0
    %v467 = vadd.f32 %v421, %v466
    %468 = vdwg.mxu0
    %469 = vmatpush.msra.mxu0 0.0
    %470 = vmatpush.msra.mxu0 0.0
    %471 = vmatpush.msra.mxu0 0.0
    %472 = vmatpush.msra.mxu0 0.0
    %v473 = vand.u32 %v296, 4294901760
    %474 = vmatpush.msra.mxu0 %v473
    %v475 = vand.u32 %v295, 4294901760
    %476 = vmatpush.msra.mxu0 %v475
    %v477 = vand.u32 %v294, 4294901760
    %478 = vmatpush.msra.mxu0 %v477
    %v479 = vand.u32 %v293, 4294901760
    %480 = vmatpush.msra.mxu0 %v479
    %v481 = vand.u32 %v292, 4294901760
    %482 = vmatpush.msra.mxu0 %v481
    %v483 = vand.u32 %v291, 4294901760
    %484 = vmatpush.msra.mxu0 %v483
    %v485 = vand.u32 %v290, 4294901760
    %486 = vmatpush.msra.mxu0 %v485
    %v487 = vand.u32 %v289, 4294901760
    %488 = vmatpush.msra.mxu0 %v487
    %v489 = vand.u32 %v288, 4294901760
    %490 = vmatpush.msra.mxu0 %v489
    %v491 = vand.u32 %v287, 4294901760
    %492 = vmatpush.msra.mxu0 %v491
    %v493 = vand.u32 %v286, 4294901760
    %494 = vmatpush.msra.mxu0 %v493
    %v495 = vand.u32 %v285, 4294901760
    %496 = vmatpush.msra.mxu0 %v495
    %v497 = vand.u32 %v303, 4294901760
    %v498 = vsub.f32 %v303, %v497
    %v499 = vand.u32 %v498, 4294901760
    %500 = vmatmul.f32.gmra.mxu0 %v499
    %v501 = vpop.f32.mrf.mxu0
    %v502 = vadd.f32 %v467, %v501
    %503 = vdwg.mxu0
    %504 = vmatpush.msra.mxu0 0.0
    %505 = vmatpush.msra.mxu0 0.0
    %506 = vmatpush.msra.mxu0 0.0
    %507 = vmatpush.msra.mxu0 0.0
    %v508 = vand.u32 %v296, 4294901760
    %v509 = vsub.f32 %v296, %v508
    %v510 = vand.u32 %v509, 4294901760
    %511 = vmatpush.msra.mxu0 %v510
    %v512 = vand.u32 %v295, 4294901760
    %v513 = vsub.f32 %v295, %v512
    %v514 = vand.u32 %v513, 4294901760
    %515 = vmatpush.msra.mxu0 %v514
    %v516 = vand.u32 %v294, 4294901760
    %v517 = vsub.f32 %v294, %v516
    %v518 = vand.u32 %v517, 4294901760
    %519 = vmatpush.msra.mxu0 %v518
    %v520 = vand.u32 %v293, 4294901760
    %v521 = vsub.f32 %v293, %v520
    %v522 = vand.u32 %v521, 4294901760
    %523 = vmatpush.msra.mxu0 %v522
    %v524 = vand.u32 %v292, 4294901760
    %v525 = vsub.f32 %v292, %v524
    %v526 = vand.u32 %v525, 4294901760
    %527 = vmatpush.msra.mxu0 %v526
    %v528 = vand.u32 %v291, 4294901760
    %v529 = vsub.f32 %v291, %v528
    %v530 = vand.u32 %v529, 4294901760
    %531 = vmatpush.msra.mxu0 %v530
    %v532 = vand.u32 %v290, 4294901760
    %v533 = vsub.f32 %v290, %v532
    %v534 = vand.u32 %v533, 4294901760
    %535 = vmatpush.msra.mxu0 %v534
    %v536 = vand.u32 %v289, 4294901760
    %v537 = vsub.f32 %v289, %v536
    %v538 = vand.u32 %v537, 4294901760
    %539 = vmatpush.msra.mxu0 %v538
    %v540 = vand.u32 %v288, 4294901760
    %v541 = vsub.f32 %v288, %v540
    %v542 = vand.u32 %v541, 4294901760
    %543 = vmatpush.msra.mxu0 %v542
    %v544 = vand.u32 %v287, 4294901760
    %v545 = vsub.f32 %v287, %v544
    %v546 = vand.u32 %v545, 4294901760
    %547 = vmatpush.msra.mxu0 %v546
    %v548 = vand.u32 %v286, 4294901760
    %v549 = vsub.f32 %v286, %v548
    %v550 = vand.u32 %v549, 4294901760
    %551 = vmatpush.msra.mxu0 %v550
    %v552 = vand.u32 %v285, 4294901760
    %v553 = vsub.f32 %v285, %v552
    %v554 = vand.u32 %v553, 4294901760
    %555 = vmatpush.msra.mxu0 %v554
    %v556 = vand.u32 %v303, 4294901760
    %557 = vmatmul.f32.gmra.mxu0 %v556
    %v558 = vpop.f32.mrf.mxu0
    %v559 = vadd.f32 %v502, %v558
    %560 = vdwg.mxu0
    %561 = vmatpush.msra.mxu0 0.0
    %562 = vmatpush.msra.mxu0 0.0
    %563 = vmatpush.msra.mxu0 0.0
    %564 = vmatpush.msra.mxu0 0.0
    %v565 = vand.u32 %v296, 4294901760
    %566 = vmatpush.msra.mxu0 %v565
    %v567 = vand.u32 %v295, 4294901760
    %568 = vmatpush.msra.mxu0 %v567
    %v569 = vand.u32 %v294, 4294901760
    %570 = vmatpush.msra.mxu0 %v569
    %v571 = vand.u32 %v293, 4294901760
    %572 = vmatpush.msra.mxu0 %v571
    %v573 = vand.u32 %v292, 4294901760
    %574 = vmatpush.msra.mxu0 %v573
    %v575 = vand.u32 %v291, 4294901760
    %576 = vmatpush.msra.mxu0 %v575
    %v577 = vand.u32 %v290, 4294901760
    %578 = vmatpush.msra.mxu0 %v577
    %v579 = vand.u32 %v289, 4294901760
    %580 = vmatpush.msra.mxu0 %v579
    %v581 = vand.u32 %v288, 4294901760
    %582 = vmatpush.msra.mxu0 %v581
    %v583 = vand.u32 %v287, 4294901760
    %584 = vmatpush.msra.mxu0 %v583
    %v585 = vand.u32 %v286, 4294901760
    %586 = vmatpush.msra.mxu0 %v585
    %v587 = vand.u32 %v285, 4294901760
    %588 = vmatpush.msra.mxu0 %v587
    %v589 = vand.u32 %v303, 4294901760
    %590 = vmatmul.f32.gmra.mxu0 %v589
    %v591 = vpop.f32.mrf.mxu0
    %v592 = vadd.f32 %v559, %v591
    %593 = vdwg.mxu0
    %v594 = vmul.f32 %v282, 1.442695
    %v595 = vpow.pop %v594
    %v596 = vadd.f32 %v595, 2e-08
    %v597 = vrcp.pop %v596
    %v598 = vmul.f32 %v596, %v597
    %v599 = vsub.f32 1.0, %v598
    %v600 = vmul.f32 %v597, %v599
    %v601 = vadd.f32 %v597, %v600
    %vm602 = vweird.f32 %v596
    %vm603 = vweird.f32 %v597
    %vm604 = vmor %vm602, %vm603
    %v605 = vsel %vm604, %v597, %v601
    %v606 = vand.u32 2147483647, %v596
    %vm607 = vcmp.eq.f32.partialorder %v606, 8.507059e+37
    %v608 = vand.u32 %v596, 2147483648
    %v609 = vor.u32 1.1754944e-38, %v608
    %v610 = vsel %vm607, %v609, %v605
    %v611 = vmul.f32 1.0, %v610
    %v612 = vmul.f32 %v592, 1.442695
    %v613 = vpow.pop %v612
    %v614 = vadd.f32 %v613, 2e-08
    %v615 = vrcp.pop %v614
    %v616 = vmul.f32 %v614, %v615
    %v617 = vsub.f32 1.0, %v616
    %v618 = vmul.f32 %v615, %v617
    %v619 = vadd.f32 %v615, %v618
    %vm620 = vweird.f32 %v614
    %vm621 = vweird.f32 %v615
    %vm622 = vmor %vm620, %vm621
    %v623 = vsel %vm622, %v615, %v619
    %v624 = vand.u32 2147483647, %v614
    %vm625 = vcmp.eq.f32.partialorder %v624, 8.507059e+37
    %v626 = vand.u32 %v614, 2147483648
    %v627 = vor.u32 1.1754944e-38, %v626
    %v628 = vsel %vm625, %v627, %v623
    %v629 = vmul.f32 1.0, %v628
    %v630 = vadd.f32 %v611, 1.0
    %v631 = vadd.f32 %v630, %v629
    %v632 = vrcp.pop %v631
    %v633 = vmul.f32 %v631, %v632
    %v634 = vsub.f32 1.0, %v633
    %v635 = vmul.f32 %v632, %v634
    %v636 = vadd.f32 %v632, %v635
    %vm637 = vweird.f32 %v631
    %vm638 = vweird.f32 %v632
    %vm639 = vmor %vm637, %vm638
    %v640 = vsel %vm639, %v632, %v636
    %v641 = vand.u32 2147483647, %v631
    %vm642 = vcmp.eq.f32.partialorder %v641, 8.507059e+37
    %v643 = vand.u32 %v631, 2147483648
    %v644 = vor.u32 1.1754944e-38, %v643
    %v645 = vsel %vm642, %v644, %v640
    %v646 = vmul.f32 1.0, %v645
    %648 = vrot.lane.b32.xlu0 %v611, 96
    %v649 = vpop.permute.xlu0 %648
    %v651 = vmul.f32 %v282, %v649
    %653 = vrot.lane.b32.xlu0 %v629, 96
    %v654 = vpop.permute.xlu0 %653
    %v656 = vmul.f32 %v592, %v654
    %v657 = vadd.f32 %v651, %v656
    %659 = vrot.lane.b32.xlu0 %v646, 96
    %v660 = vpop.permute.xlu0 %659
    %v662 = vmul.f32 %v657, %v660
    %v663 = vadd.f32 %v646, 1e-08
    %v664 = vlog2.pop %v663
    %v665 = vmul.f32 %v664, 0.6931472
    %v666 = vld [vmem:[%s6] sm:$0xff]
    %v667 = vld [vmem:[%s6 + $0x8] sm:$0xff]
    %v668 = vld [vmem:[%s6 + $0x10] sm:$0xff]
    %v669 = vld [vmem:[%s6 + $0x18] sm:$0xff]
    %v670 = vld [vmem:[%s7] sm:$0x1]
    %v672 = vperm.slane %v670, 0
    %vm674 = vcmask 261120
    %v676 = vsel %vm674, %v662, 0
    %678 = vmatpush.msra.mxu0 0.0
    %679 = vmatpush.msra.mxu0 0.0
    %680 = vmatpush.msra.mxu0 0.0
    %681 = vmatpush.msra.mxu0 0.0
    %682 = vmatpush.msra.mxu0 0.0
    %683 = vmatpush.msra.mxu0 0.0
    %684 = vmatpush.msra.mxu0 0.0
    %685 = vmatpush.msra.mxu0 0.0
    %686 = vmatpush.msra.mxu0 0.0
    %687 = vmatpush.msra.mxu0 0.0
    %688 = vmatpush.msra.mxu0 0.0
    %689 = vmatpush.msra.mxu0 0.0
    %v690 = vand.u32 %v669, 4294901760
    %691 = vmatpush.msra.mxu0 %v690
    %v692 = vand.u32 %v668, 4294901760
    %693 = vmatpush.msra.mxu0 %v692
    %v694 = vand.u32 %v667, 4294901760
    %695 = vmatpush.msra.mxu0 %v694
    %v696 = vand.u32 %v666, 4294901760
    %697 = vmatpush.msra.mxu0 %v696
    %v698 = vand.u32 %v676, 4294901760
    %v699 = vsub.f32 %v676, %v698
    %v700 = vand.u32 %v699, 4294901760
    %v701 = vsub.f32 %v699, %v700
    %v702 = vand.u32 %v701, 4294901760
    %703 = vmatmul.f32.gmra.mxu0 %v702
    %v704 = vpop.f32.mrf.mxu0
    %v705 = vadd.f32 %v672, %v704
    %706 = vdwg.mxu0
    %707 = vmatpush.msra.mxu0 0.0
    %708 = vmatpush.msra.mxu0 0.0
    %709 = vmatpush.msra.mxu0 0.0
    %710 = vmatpush.msra.mxu0 0.0
    %711 = vmatpush.msra.mxu0 0.0
    %712 = vmatpush.msra.mxu0 0.0
    %713 = vmatpush.msra.mxu0 0.0
    %714 = vmatpush.msra.mxu0 0.0
    %715 = vmatpush.msra.mxu0 0.0
    %716 = vmatpush.msra.mxu0 0.0
    %717 = vmatpush.msra.mxu0 0.0
    %718 = vmatpush.msra.mxu0 0.0
    %v719 = vand.u32 %v669, 4294901760
    %v720 = vsub.f32 %v669, %v719
    %v721 = vand.u32 %v720, 4294901760
    %v722 = vsub.f32 %v720, %v721
    %v723 = vand.u32 %v722, 4294901760
    %724 = vmatpush.msra.mxu0 %v723
    %v725 = vand.u32 %v668, 4294901760
    %v726 = vsub.f32 %v668, %v725
    %v727 = vand.u32 %v726, 4294901760
    %v728 = vsub.f32 %v726, %v727
    %v729 = vand.u32 %v728, 4294901760
    %730 = vmatpush.msra.mxu0 %v729
    %v731 = vand.u32 %v667, 4294901760
    %v732 = vsub.f32 %v667, %v731
    %v733 = vand.u32 %v732, 4294901760
    %v734 = vsub.f32 %v732, %v733
    %v735 = vand.u32 %v734, 4294901760
    %736 = vmatpush.msra.mxu0 %v735
    %v737 = vand.u32 %v666, 4294901760
    %v738 = vsub.f32 %v666, %v737
    %v739 = vand.u32 %v738, 4294901760
    %v740 = vsub.f32 %v738, %v739
    %v741 = vand.u32 %v740, 4294901760
    %742 = vmatpush.msra.mxu0 %v741
    %v743 = vand.u32 %v676, 4294901760
    %744 = vmatmul.f32.gmra.mxu0 %v743
    %v745 = vpop.f32.mrf.mxu0
    %v746 = vadd.f32 %v705, %v745
    %747 = vdwg.mxu0
    %748 = vmatpush.msra.mxu0 0.0
    %749 = vmatpush.msra.mxu0 0.0
    %750 = vmatpush.msra.mxu0 0.0
    %751 = vmatpush.msra.mxu0 0.0
    %752 = vmatpush.msra.mxu0 0.0
    %753 = vmatpush.msra.mxu0 0.0
    %754 = vmatpush.msra.mxu0 0.0
    %755 = vmatpush.msra.mxu0 0.0
    %756 = vmatpush.msra.mxu0 0.0
    %757 = vmatpush.msra.mxu0 0.0
    %758 = vmatpush.msra.mxu0 0.0
    %759 = vmatpush.msra.mxu0 0.0
    %v760 = vand.u32 %v669, 4294901760
    %v761 = vsub.f32 %v669, %v760
    %762 = vmatpush.msra.mxu0 %v761
    %v763 = vand.u32 %v668, 4294901760
    %v764 = vsub.f32 %v668, %v763
    %765 = vmatpush.msra.mxu0 %v764
    %v766 = vand.u32 %v667, 4294901760
    %v767 = vsub.f32 %v667, %v766
    %768 = vmatpush.msra.mxu0 %v767
    %v769 = vand.u32 %v666, 4294901760
    %v770 = vsub.f32 %v666, %v769
    %771 = vmatpush.msra.mxu0 %v770
    %v772 = vand.u32 %v676, 4294901760
    %v773 = vsub.f32 %v676, %v772
    %774 = vmatmul.f32.gmra.mxu0 %v773
    %v775 = vpop.f32.mrf.mxu0
    %v776 = vadd.f32 %v746, %v775
    %777 = vdwg.mxu0
    %778 = vmatpush.msra.mxu0 0.0
    %779 = vmatpush.msra.mxu0 0.0
    %780 = vmatpush.msra.mxu0 0.0
    %781 = vmatpush.msra.mxu0 0.0
    %782 = vmatpush.msra.mxu0 0.0
    %783 = vmatpush.msra.mxu0 0.0
    %784 = vmatpush.msra.mxu0 0.0
    %785 = vmatpush.msra.mxu0 0.0
    %786 = vmatpush.msra.mxu0 0.0
    %787 = vmatpush.msra.mxu0 0.0
    %788 = vmatpush.msra.mxu0 0.0
    %789 = vmatpush.msra.mxu0 0.0
    %v790 = vand.u32 %v669, 4294901760
    %791 = vmatpush.msra.mxu0 %v790
    %v792 = vand.u32 %v668, 4294901760
    %793 = vmatpush.msra.mxu0 %v792
    %v794 = vand.u32 %v667, 4294901760
    %795 = vmatpush.msra.mxu0 %v794
    %v796 = vand.u32 %v666, 4294901760
    %797 = vmatpush.msra.mxu0 %v796
    %v798 = vand.u32 %v676, 4294901760
    %v799 = vsub.f32 %v676, %v798
    %v800 = vand.u32 %v799, 4294901760
    %801 = vmatmul.f32.gmra.mxu0 %v800
    %v802 = vpop.f32.mrf.mxu0
    %v803 = vadd.f32 %v776, %v802
    %804 = vdwg.mxu0
    %805 = vmatpush.msra.mxu0 0.0
    %806 = vmatpush.msra.mxu0 0.0
    %807 = vmatpush.msra.mxu0 0.0
    %808 = vmatpush.msra.mxu0 0.0
    %809 = vmatpush.msra.mxu0 0.0
    %810 = vmatpush.msra.mxu0 0.0
    %811 = vmatpush.msra.mxu0 0.0
    %812 = vmatpush.msra.mxu0 0.0
    %813 = vmatpush.msra.mxu0 0.0
    %814 = vmatpush.msra.mxu0 0.0
    %815 = vmatpush.msra.mxu0 0.0
    %816 = vmatpush.msra.mxu0 0.0
    %v817 = vand.u32 %v669, 4294901760
    %v818 = vsub.f32 %v669, %v817
    %v819 = vand.u32 %v818, 4294901760
    %820 = vmatpush.msra.mxu0 %v819
    %v821 = vand.u32 %v668, 4294901760
    %v822 = vsub.f32 %v668, %v821
    %v823 = vand.u32 %v822, 4294901760
    %824 = vmatpush.msra.mxu0 %v823
    %v825 = vand.u32 %v667, 4294901760
    %v826 = vsub.f32 %v667, %v825
    %v827 = vand.u32 %v826, 4294901760
    %828 = vmatpush.msra.mxu0 %v827
    %v829 = vand.u32 %v666, 4294901760
    %v830 = vsub.f32 %v666, %v829
    %v831 = vand.u32 %v830, 4294901760
    %832 = vmatpush.msra.mxu0 %v831
    %v833 = vand.u32 %v676, 4294901760
    %834 = vmatmul.f32.gmra.mxu0 %v833
    %v835 = vpop.f32.mrf.mxu0
    %v836 = vadd.f32 %v803, %v835
    %837 = vdwg.mxu0
    %838 = vmatpush.msra.mxu0 0.0
    %839 = vmatpush.msra.mxu0 0.0
    %840 = vmatpush.msra.mxu0 0.0
    %841 = vmatpush.msra.mxu0 0.0
    %842 = vmatpush.msra.mxu0 0.0
    %843 = vmatpush.msra.mxu0 0.0
    %844 = vmatpush.msra.mxu0 0.0
    %845 = vmatpush.msra.mxu0 0.0
    %846 = vmatpush.msra.mxu0 0.0
    %847 = vmatpush.msra.mxu0 0.0
    %848 = vmatpush.msra.mxu0 0.0
    %849 = vmatpush.msra.mxu0 0.0
    %v850 = vand.u32 %v669, 4294901760
    %851 = vmatpush.msra.mxu0 %v850
    %v852 = vand.u32 %v668, 4294901760
    %853 = vmatpush.msra.mxu0 %v852
    %v854 = vand.u32 %v667, 4294901760
    %855 = vmatpush.msra.mxu0 %v854
    %v856 = vand.u32 %v666, 4294901760
    %857 = vmatpush.msra.mxu0 %v856
    %v858 = vand.u32 %v676, 4294901760
    %859 = vmatmul.f32.gmra.mxu0 %v858
    %v860 = vpop.f32.mrf.mxu0
    %v861 = vadd.f32 %v836, %v860
    %862 = vdwg.mxu0
    %864 = vrot.lane.b32.xlu0 %v861, 64
    %v865 = vpop.permute.xlu0 %864
    %v867 = vsel %vm674, %v662, %v665
    %v868 = vsel %vm43, %v867, %v865
    %vm869 = vcmask 547840
    %v870 = vsel %vm869, %v868, 0.0
    %871 = vst [vmem:[#allocation2] sm:$0xff] %v870
    // Predicated region
    $region34: #{tpu_custom_call.1} parent=1 // pred_check
      _
    $region35: #{tpu_custom_call.1} parent=1 // pred_check_branch
      %873 = sbr.rel (0) target = $region37
    $region36: #{tpu_custom_call.1} parent=1 // pred_region
      %875 = vsyncadd [#allocation3], 0
      %s877 = sshll.u32 [#allocation2], 4
      %s878 = int_to_ptr.vmem [resolvable:$true] %s877
      %s879 = sshll.u32 %s8, 4
      %s880 = int_to_ptr.hbm [resolvable:$true] %s879
      %882 = dma.vmem_to_hbm [thread:$0]  %s878, 128, %s880, [#allocation3]
    $region37: #{tpu_custom_call.1} parent=1 // pred_fallthru
      _
    // Predicated region
    $region38: #{tpu_custom_call.1} parent=1 // pred_check
      _
    $region39: #{tpu_custom_call.1} parent=1 // pred_check_branch
      %884 = sbr.rel (0) target = $region41
    $region40: #{tpu_custom_call.1} parent=1 // pred_region
      %886 = dma.done [#allocation3], 128
    $region41: #{tpu_custom_call.1} parent=1 // pred_fallthru
      _
    %887 = vsyncpa [#allocation3], 1

</llo_original>
